<compile_context>
chip_gen: v5e
topology: v5e:2x2
jax: 0.10.0
libtpu: 0.0.40
codegen_flags: <defaults>
</compile_context>

<pallas_src>
import functools

import jax
import jax.numpy as jnp
from jax.experimental import pallas as pl
from jax.experimental.pallas import tpu as pltpu


def _round_up(x, m):
    return (x + m - 1) // m * m


def _pad2d(a, rows, cols):
    return jnp.pad(a, ((0, rows - a.shape[0]), (0, cols - a.shape[1])))


def _cnn_kernel(kernel_sizes, feat_sizes, L, CH, n_main, EP, num_fc,
                xe_ref, cw_ref, cb_ref, *refs):
    """One batch tile: packed multi-branch conv with a time-chunked running
    max-pool, then the Dense stack and the output Linear."""
    fc_refs = refs[:2 * num_fc]                       # fw0, fb0, fw1, fb1, ...
    ow_ref, ob_ref, out_ref = refs[2 * num_fc:]

    TB, L_pad, E = xe_ref.shape
    K, Fp = cw_ref.shape                              # K = max_k * E
    max_k = K // E
    min_k = min(kernel_sizes)

    # Per-tap row blocks of the packed conv weight (hoisted out of the loops).
    w_taps = [cw_ref[dk * E:(dk + 1) * E, :] for dk in range(max_k)]

    def conv_chunk(t0, n_rows):
        """[TB, n_rows, Fp] f32 conv outputs (all branches at once) for time
        positions t0 .. t0+n_rows-1, via per-tap accumulated matmuls."""
        win = xe_ref[:, pl.ds(t0, n_rows + max_k - 1), :]        # one window load
        acc = jnp.zeros((TB * n_rows, Fp), jnp.float32)
        for dk in range(max_k):
            xt = win[:, dk:dk + n_rows, :].reshape(TB * n_rows, E)
            acc = acc + jnp.dot(xt, w_taps[dk],
                                preferred_element_type=jnp.float32)
        return acc.reshape(TB, n_rows, Fp)

    runmax = jnp.full((TB, Fp), -jnp.inf, jnp.float32)

    # ---- main region: positions [0, n_main*CH) are valid for EVERY branch.
    if 0 < n_main <= 8:                               # static unroll for short loops
        for c in range(n_main):
            runmax = jnp.maximum(runmax,
                                 jnp.max(conv_chunk(c * CH, CH), axis=1))
    elif n_main > 8:
        def body(c, rm):
            t0 = pl.multiple_of(c * CH, 8)            # CH is a multiple of 8
            return jnp.maximum(rm, jnp.max(conv_chunk(t0, CH), axis=1))
        runmax = jax.lax.fori_loop(0, n_main, body, runmax)

    # ---- epilogue: the remainder of the common region plus the (max_k - k_i)
    # trailing positions only valid for shorter-kernel branches.  A static
    # per-position column-validity mask keeps the max exact; the wrapper has
    # zero-padded the time axis so every window read is in range.
    if EP > 0:
        t0 = n_main * CH
        vals = conv_chunk(t0, EP)                     # [TB, EP, Fp]
        row = jax.lax.broadcasted_iota(jnp.int32, (EP, Fp), 0)
        col = jax.lax.broadcasted_iota(jnp.int32, (EP, Fp), 1)
        # row r (position t0+r) is valid for a column of kernel size k iff
        # r <= L - k - t0.  Default threshold (min_k) also covers the zero
        # padding columns so they always receive a finite value.
        thr = jnp.full((EP, Fp), L - min_k - t0, jnp.int32)
        off = 0
        for k_i, F_i in zip(kernel_sizes, feat_sizes):
            if k_i != min_k:
                thr = jnp.where((col >= off) & (col < off + F_i),
                                jnp.int32(L - k_i - t0), thr)
            off += F_i
        vals = jnp.where((row <= thr)[None], vals, -jnp.inf)
        runmax = jnp.maximum(runmax, jnp.max(vals, axis=1))

    # Max-pool done; the conv bias is time-constant, so adding it after the
    # pool is exact.
    h = runmax + cb_ref[...]                          # [TB, Fp] f32

    # TODO(synk): embed_dropout / dropout are identity at inference; not implemented.
    for j in range(num_fc):                           # Dense = Linear + ReLU
        w_ref = fc_refs[2 * j]
        b_ref = fc_refs[2 * j + 1]
        h = jnp.maximum(
            jnp.dot(h.astype(w_ref.dtype), w_ref[...],
                    preferred_element_type=jnp.float32) + b_ref[...], 0.0)

    logits = jnp.dot(h.astype(ow_ref.dtype), ow_ref[...],
                     preferred_element_type=jnp.float32) + ob_ref[...]
    out_ref[...] = logits.astype(out_ref.dtype)       # lane-dense [TB, Cp]


def cnn_forward(x_tokens, x_len, params, kernel_sizes, padding_idx=0,
                compute_dtype=jnp.bfloat16):
    LANE = 128
    B, L = x_tokens.shape
    kernel_sizes = tuple(int(k) for k in kernel_sizes)
    max_k, min_k = max(kernel_sizes), min(kernel_sizes)
    assert L >= max_k, "sequence length must be >= max kernel size"

    # ---- length mask moved to the wrapper: tokens past x_len become
    # padding_idx, and the padding_idx embedding row is forced to zero, so the
    # kernel sees already-masked embeddings (no in-kernel iota / where).
    table = params['embedding'].at[padding_idx].set(0.0)
    pos = jnp.arange(L, dtype=jnp.int32)[None, :]
    tok = jnp.where(pos < x_len[:, None].astype(jnp.int32), x_tokens, padding_idx)
    emb = table[tok].astype(compute_dtype)                    # [B, L, E] bf16
    E = emb.shape[-1]

    nconv = len(kernel_sizes)
    feat_sizes = tuple(int(params[f'cw{i}'].shape[-1]) for i in range(nconv))
    Fsum = sum(feat_sizes)
    Fp = _round_up(Fsum, LANE)
    num_fc = len([k for k in params if k.startswith('fw')])
    fc_dims = [params[f'fw{j}'].shape[-1] for j in range(num_fc)]
    num_cls = params['ow'].shape[-1]
    Cp = _round_up(num_cls, LANE)
    FC0p = _round_up(fc_dims[0], LANE)
    K = max_k * E

    # ---- pack all conv branches into one [max_k*E, Fp] weight: branch i uses
    # rows 0:k_i*E and columns off_i:off_i+F_i (zeros elsewhere), so one set of
    # matmuls serves every branch and fw0 stays unsplit.
    cw = jnp.zeros((K, Fp), jnp.float32)
    cb = jnp.zeros((1, Fp), jnp.float32)
    off = 0
    for i, (k, F) in enumerate(zip(kernel_sizes, feat_sizes)):
        w = params[f'cw{i}'].reshape(k * E, F)                # [k, E, F] -> [k*E, F]
        cw = cw.at[:k * E, off:off + F].set(w)
        cb = cb.at[:, off:off + F].set(params[f'cb{i}'])
        off += F
    weights = [cw.astype(compute_dtype), cb.astype(jnp.float32)]

    prev_p = Fp                                               # fw0 rows line up with
    for j in range(num_fc):                                   # the packed column order
        Dp = _round_up(fc_dims[j], LANE)
        weights.append(_pad2d(params[f'fw{j}'], prev_p, Dp).astype(compute_dtype))
        weights.append(_pad2d(params[f'fb{j}'], 1, Dp).astype(jnp.float32))
        prev_p = Dp
    weights.append(_pad2d(params['ow'], prev_p, Cp).astype(compute_dtype))
    weights.append(_pad2d(params['ob'], 1, Cp).astype(jnp.float32))
    weight_bytes = sum(int(w.size) * w.dtype.itemsize for w in weights)

    # ---- batch tile / time chunk selection with an explicit VMEM budget.
    # The E=32 tile is stored 128-lane padded, so the emb block costs
    # round_up(E,128)/E times its logical bytes; that factor is included here.
    # TODO(synk): fold 128//E timesteps into lanes ([B, L/4, 128]) to remove
    # the 4x lane padding entirely; needs lane-roll tap shifts.
    L_out = L - max_k + 1
    tail = max_k - min_k
    elane = _round_up(E, LANE)

    def _ch_for(tb):                                          # keep M = TB*CH >= 256
        ch = max(8, _round_up(max(1, 256 // tb), 8))
        return min(ch, _round_up(L_out, 8))

    BUDGET = 36 * 1024 * 1024
    def _vmem_est(tb, ch):
        l_pad_est = L + ch + max_k
        return (2 * tb * l_pad_est * elane * 2                # emb, double-buffered
                + 2 * tb * Cp * 4                             # out, double-buffered
                + 2 * weight_bytes                            # resident weights (2 bufs)
                + tb * ch * (Fp * 4 + 2 * elane * 2)          # chunk acc + window
                + tb * (Fp + FC0p + max(FC0p, Cp)) * 4)       # runmax / h / logits

    TB = min(256, _round_up(B, 8))
    while TB > 8 and _vmem_est(TB, _ch_for(TB)) > BUDGET:
        TB -= 8
    # keep >= 3-4 grid steps when the batch allows (hides the emb DMA behind
    # compute and lets the "parallel" axis split across the 2 v7x TensorCores)
    if B >= 4 * 8:
        TB = min(TB, max(8, _round_up((B + 3) // 4, 8)))
    CH = _ch_for(TB)

    n_main = L_out // CH                                      # full all-branch chunks
    rem = L_out - n_main * CH
    n_epi = rem + tail                                        # epilogue positions
    EP = _round_up(n_epi, 8) if n_epi > 0 else 0
    L_pad = (n_main * CH + EP + max_k - 1) if EP > 0 else L   # zero time padding so
                                                              # epilogue reads stay in range
    B_pad = _round_up(B, TB)
    emb = jnp.pad(emb, ((0, B_pad - B), (0, L_pad - L), (0, 0)))

    def _resident(arr):                                       # weight stays in VMEM
        nd = arr.ndim                                         # (constant index_map)
        return pl.BlockSpec(arr.shape, lambda b, _nd=nd: (0,) * _nd)

    in_specs = ([pl.BlockSpec((TB, L_pad, E), lambda b: (b, 0, 0))]
                + [_resident(w) for w in weights])

    vmem_limit = int(min(56 * 1024 * 1024,
                         max(32 * 1024 * 1024,
                             _vmem_est(TB, CH) + 16 * 1024 * 1024)))

    kernel = functools.partial(_cnn_kernel, kernel_sizes, feat_sizes,
                               L, CH, n_main, EP, num_fc)
    out = pl.pallas_call(
        kernel,
        grid=(B_pad // TB,),
        out_shape=jax.ShapeDtypeStruct((B_pad, Cp), jnp.float32),
        in_specs=in_specs,
        out_specs=pl.BlockSpec((TB, Cp), lambda b: (b, 0)),
        compiler_params=pltpu.CompilerParams(
            dimension_semantics=("parallel",),
            vmem_limit_bytes=vmem_limit),
    )(emb, *weights)
    return out[:B, :num_cls]


def init_params(key, num_cls, n_embeddings, embedding_size, padding_idx,
                feature_size, kernel_size, fc_size):
    keys = jax.random.split(key, 16)
    E = embedding_size
    emb = 0.1 * jax.random.normal(keys[0], (n_embeddings, E), jnp.float32)
    emb = emb.at[padding_idx].set(0.0)                       # padding_idx row = 0
    params = {'embedding': emb}
    # Conv1d weights stored as [k, in_ch(E), out_ch(F)] (transposed PyTorch [F, E, k]).
    for i, (fs, ks) in enumerate(zip(feature_size, kernel_size)):
        params[f'cw{i}'] = 0.1 * jax.random.normal(keys[1 + i], (ks, E, fs), jnp.float32)
        params[f'cb{i}'] = 0.1 * jax.random.normal(keys[4 + i], (1, fs), jnp.float32)
    # fc_size = zip([sum(feature_size)] + fc_size[1:], fc_size)  (original semantics)
    fc_in = [sum(feature_size)] + list(fc_size)[1:]
    for i, (din, dout) in enumerate(zip(fc_in, fc_size)):
        params[f'fw{i}'] = 0.1 * jax.random.normal(keys[7 + 2 * i], (din, dout), jnp.float32)
        params[f'fb{i}'] = 0.1 * jax.random.normal(keys[8 + 2 * i], (1, dout), jnp.float32)
    params['ow'] = 0.1 * jax.random.normal(keys[11], (fc_size[-1], num_cls), jnp.float32)
    params['ob'] = 0.1 * jax.random.normal(keys[12], (1, num_cls), jnp.float32)
    return params


def reference_forward(x_tokens, x_len, params, kernel_sizes):
    """Pure-JAX f32 reference mirroring the PyTorch forward (eval mode)."""
    emb = params['embedding'][x_tokens]
    B, L, _ = emb.shape
    mask = (jnp.arange(L)[None, :] < x_len[:, None]).astype(jnp.float32)
    xe = emb * mask[:, :, None]
    feats = []
    for i, k in enumerate(kernel_sizes):
        w, b = params[f'cw{i}'], params[f'cb{i}']
        L_out = L - k + 1
        acc = jnp.zeros((B, L_out, w.shape[-1]), jnp.float32)
        for dk in range(k):
            acc = acc + jnp.einsum('ble,ef->blf', xe[:, dk:dk + L_out, :], w[dk])
        acc = acc + b[None, :, :]
        feats.append(jnp.max(acc, axis=1))
    h = jnp.concatenate(feats, axis=1)
    num_fc = len([kk for kk in params if kk.startswith('fw')])
    for j in range(num_fc):
        h = jnp.maximum(h @ params[f'fw{j}'] + params[f'fb{j}'], 0.0)
    return h @ params['ow'] + params['ob']


if __name__ == "__main__":
    # Small shapes consistent with the module.
    num_cls = 5
    n_embeddings = 50
    embedding_size = 32
    padding_idx = 0
    feature_size = [16, 16, 16]
    kernel_size = [2, 3, 4]
    fc_size = [32, 32]
    B, L = 2, 16

    key = jax.random.PRNGKey(0)
    kp, kx, kl = jax.random.split(key, 3)
    params = init_params(kp, num_cls, n_embeddings, embedding_size, padding_idx,
                         feature_size, kernel_size, fc_size)
    x = jax.random.randint(kx, (B, L), 1, n_embeddings, dtype=jnp.int32)
    x_len = jax.random.randint(kl, (B,), 1, L + 1, dtype=jnp.int32)

    out = jax.block_until_ready(
        cnn_forward(x, x_len, params, kernel_size, padding_idx=padding_idx))
    ref = reference_forward(x, x_len, params, kernel_size)
    assert out.shape == (B, num_cls)
    # bf16 kernel inputs vs f32 reference -> tolerance sized for bf16 rounding.
    assert jnp.allclose(out, ref, atol=2e-2, rtol=2e-2), \
        f"max abs diff {jnp.max(jnp.abs(out - ref))}"
    print("KERNEL_OK")
</pallas_src>

<mosaic_0001>
module attributes {stable_mosaic.version = 11 : i64} {
  func.func @_cnn_kernel(%arg0: i32, %arg1: memref<8x19x32xbf16, #tpu.memory_space<vmem>>, %arg2: memref<128x128xbf16, #tpu.memory_space<vmem>>, %arg3: memref<1x128xf32, #tpu.memory_space<vmem>>, %arg4: memref<128x128xbf16, #tpu.memory_space<vmem>>, %arg5: memref<1x128xf32, #tpu.memory_space<vmem>>, %arg6: memref<128x128xbf16, #tpu.memory_space<vmem>>, %arg7: memref<1x128xf32, #tpu.memory_space<vmem>>, %arg8: memref<128x128xbf16, #tpu.memory_space<vmem>>, %arg9: memref<1x128xf32, #tpu.memory_space<vmem>>, %arg10: memref<8x128xf32, #tpu.memory_space<vmem>>) attributes {dimension_semantics = [#tpu.dimension_semantics<parallel>], iteration_bounds = array<i64: 1>, scalar_prefetch = 0 : i64, scratch_operands = 0 : i64, tpu.core_type = #tpu.core_type<tc>, window_params = [{transform_indices = @transform_0, window_bounds = array<i64: 8, 19, 32>}, {pipeline_mode = #tpu.pipeline_mode<synchronous>, transform_indices = @transform_1, window_bounds = array<i64: 128, 128>}, {pipeline_mode = #tpu.pipeline_mode<synchronous>, transform_indices = @transform_2, window_bounds = array<i64: 1, 128>}, {pipeline_mode = #tpu.pipeline_mode<synchronous>, transform_indices = @transform_3, window_bounds = array<i64: 128, 128>}, {pipeline_mode = #tpu.pipeline_mode<synchronous>, transform_indices = @transform_4, window_bounds = array<i64: 1, 128>}, {pipeline_mode = #tpu.pipeline_mode<synchronous>, transform_indices = @transform_5, window_bounds = array<i64: 128, 128>}, {pipeline_mode = #tpu.pipeline_mode<synchronous>, transform_indices = @transform_6, window_bounds = array<i64: 1, 128>}, {pipeline_mode = #tpu.pipeline_mode<synchronous>, transform_indices = @transform_7, window_bounds = array<i64: 128, 128>}, {pipeline_mode = #tpu.pipeline_mode<synchronous>, transform_indices = @transform_8, window_bounds = array<i64: 1, 128>}, {transform_indices = @transform_9, window_bounds = array<i64: 8, 128>}]} {
    %c0 = arith.constant 0 : index
    %c0_0 = arith.constant 0 : index
    %0 = vector.load %arg2[%c0, %c0_0] : memref<128x128xbf16, #tpu.memory_space<vmem>>, vector<32x128xbf16>
    %c32 = arith.constant 32 : index
    %c0_1 = arith.constant 0 : index
    %1 = vector.load %arg2[%c32, %c0_1] : memref<128x128xbf16, #tpu.memory_space<vmem>>, vector<32x128xbf16>
    %c64 = arith.constant 64 : index
    %c0_2 = arith.constant 0 : index
    %2 = vector.load %arg2[%c64, %c0_2] : memref<128x128xbf16, #tpu.memory_space<vmem>>, vector<32x128xbf16>
    %c96 = arith.constant 96 : index
    %c0_3 = arith.constant 0 : index
    %3 = vector.load %arg2[%c96, %c0_3] : memref<128x128xbf16, #tpu.memory_space<vmem>>, vector<32x128xbf16>
    %cst = arith.constant 0xFF800000 : f32
    %4 = vector.broadcast %cst : f32 to vector<8x128xf32>
    %c0_4 = arith.constant 0 : index
    %c0_5 = arith.constant 0 : index
    %c0_6 = arith.constant 0 : index
    %5 = vector.load %arg1[%c0_4, %c0_5, %c0_6] : memref<8x19x32xbf16, #tpu.memory_space<vmem>>, vector<8x19x32xbf16>
    %cst_7 = arith.constant 0.000000e+00 : f32
    %6 = vector.broadcast %cst_7 : f32 to vector<128x128xf32>
    %7 = vector.extract_strided_slice %5 {offsets = [0, 0, 0], sizes = [8, 16, 32], strides = [1, 1, 1]} : vector<8x19x32xbf16> to vector<8x16x32xbf16>
    %8 = vector.shape_cast %7 : vector<8x16x32xbf16> to vector<128x32xbf16>
    %cst_8 = arith.constant dense<0.000000e+00> : vector<128x128xf32>
    %9 = tpu.matmul %8, %0, %cst_8 {dimension_numbers = #tpu.dot_dimension_numbers<[1], [0], [0], [1], [0, 0, 1, 1], [], []>} : vector<128x32xbf16>, vector<32x128xbf16>, vector<128x128xf32> -> vector<128x128xf32>
    %10 = arith.addf %6, %9 : vector<128x128xf32>
    %11 = vector.extract_strided_slice %5 {offsets = [0, 1, 0], sizes = [8, 16, 32], strides = [1, 1, 1]} : vector<8x19x32xbf16> to vector<8x16x32xbf16>
    %12 = vector.shape_cast %11 : vector<8x16x32xbf16> to vector<128x32xbf16>
    %cst_9 = arith.constant dense<0.000000e+00> : vector<128x128xf32>
    %13 = tpu.matmul %12, %1, %cst_9 {dimension_numbers = #tpu.dot_dimension_numbers<[1], [0], [0], [1], [0, 0, 1, 1], [], []>} : vector<128x32xbf16>, vector<32x128xbf16>, vector<128x128xf32> -> vector<128x128xf32>
    %14 = arith.addf %10, %13 : vector<128x128xf32>
    %15 = vector.extract_strided_slice %5 {offsets = [0, 2, 0], sizes = [8, 16, 32], strides = [1, 1, 1]} : vector<8x19x32xbf16> to vector<8x16x32xbf16>
    %16 = vector.shape_cast %15 : vector<8x16x32xbf16> to vector<128x32xbf16>
    %cst_10 = arith.constant dense<0.000000e+00> : vector<128x128xf32>
    %17 = tpu.matmul %16, %2, %cst_10 {dimension_numbers = #tpu.dot_dimension_numbers<[1], [0], [0], [1], [0, 0, 1, 1], [], []>} : vector<128x32xbf16>, vector<32x128xbf16>, vector<128x128xf32> -> vector<128x128xf32>
    %18 = arith.addf %14, %17 : vector<128x128xf32>
    %19 = vector.extract_strided_slice %5 {offsets = [0, 3, 0], sizes = [8, 16, 32], strides = [1, 1, 1]} : vector<8x19x32xbf16> to vector<8x16x32xbf16>
    %20 = vector.shape_cast %19 : vector<8x16x32xbf16> to vector<128x32xbf16>
    %cst_11 = arith.constant dense<0.000000e+00> : vector<128x128xf32>
    %21 = tpu.matmul %20, %3, %cst_11 {dimension_numbers = #tpu.dot_dimension_numbers<[1], [0], [0], [1], [0, 0, 1, 1], [], []>} : vector<128x32xbf16>, vector<32x128xbf16>, vector<128x128xf32> -> vector<128x128xf32>
    %22 = arith.addf %18, %21 : vector<128x128xf32>
    %23 = vector.shape_cast %22 : vector<128x128xf32> to vector<8x16x128xf32>
    %24 = tpu.iota {dimensions = array<i32: 0>} : vector<16x128xi32>
    %25 = tpu.iota {dimensions = array<i32: 1>} : vector<16x128xi32>
    %c14_i32 = arith.constant 14 : i32
    %26 = vector.broadcast %c14_i32 : i32 to vector<16x128xi32>
    %c16_i32 = arith.constant 16 : i32
    %27 = vector.broadcast %c16_i32 : i32 to vector<16x128xi32>
    %28 = arith.cmpi sge, %25, %27 : vector<16x128xi32>
    %c32_i32 = arith.constant 32 : i32
    %29 = vector.broadcast %c32_i32 : i32 to vector<16x128xi32>
    %30 = arith.cmpi slt, %25, %29 : vector<16x128xi32>
    %31 = arith.andi %28, %30 : vector<16x128xi1>
    %c13_i32 = arith.constant 13 : i32
    %32 = vector.broadcast %c13_i32 : i32 to vector<16x128xi32>
    %33 = arith.select %31, %32, %26 : vector<16x128xi1>, vector<16x128xi32>
    %c32_i32_12 = arith.constant 32 : i32
    %34 = vector.broadcast %c32_i32_12 : i32 to vector<16x128xi32>
    %35 = arith.cmpi sge, %25, %34 : vector<16x128xi32>
    %c48_i32 = arith.constant 48 : i32
    %36 = vector.broadcast %c48_i32 : i32 to vector<16x128xi32>
    %37 = arith.cmpi slt, %25, %36 : vector<16x128xi32>
    %38 = arith.andi %35, %37 : vector<16x128xi1>
    %c12_i32 = arith.constant 12 : i32
    %39 = vector.broadcast %c12_i32 : i32 to vector<16x128xi32>
    %40 = arith.select %38, %39, %33 : vector<16x128xi1>, vector<16x128xi32>
    %41 = arith.cmpi sle, %24, %40 : vector<16x128xi32>
    %42 = vector.shape_cast %41 : vector<16x128xi1> to vector<1x16x128xi1>
    %cst_13 = arith.constant 0xFF800000 : f32
    %43 = vector.shape_cast %42 : vector<1x16x128xi1> to vector<1x16x128xi1>
    %44 = vector.broadcast %43 : vector<1x16x128xi1> to vector<8x16x128xi1>
    %45 = vector.broadcast %cst_13 : f32 to vector<8x16x128xf32>
    %46 = arith.select %44, %23, %45 : vector<8x16x128xi1>, vector<8x16x128xf32>
    %cst_14 = arith.constant dense<0xFF800000> : vector<8x128xf32>
    %47 = vector.multi_reduction <maximumf>, %46, %cst_14 [1] : vector<8x16x128xf32> to vector<8x128xf32>
    %48 = arith.maximumf %4, %47 : vector<8x128xf32>
    %c0_15 = arith.constant 0 : index
    %c0_16 = arith.constant 0 : index
    %49 = vector.load %arg3[%c0_15, %c0_16] : memref<1x128xf32, #tpu.memory_space<vmem>>, vector<1x128xf32>
    %50 = vector.broadcast %49 : vector<1x128xf32> to vector<8x128xf32>
    %51 = arith.addf %48, %50 : vector<8x128xf32>
    %52 = arith.truncf %51 : vector<8x128xf32> to vector<8x128xbf16>
    %c0_17 = arith.constant 0 : index
    %c0_18 = arith.constant 0 : index
    %53 = vector.load %arg4[%c0_17, %c0_18] : memref<128x128xbf16, #tpu.memory_space<vmem>>, vector<128x128xbf16>
    %cst_19 = arith.constant dense<0.000000e+00> : vector<8x128xf32>
    %54 = tpu.matmul %52, %53, %cst_19 {dimension_numbers = #tpu.dot_dimension_numbers<[1], [0], [0], [1], [0, 0, 1, 1], [], []>} : vector<8x128xbf16>, vector<128x128xbf16>, vector<8x128xf32> -> vector<8x128xf32>
    %c0_20 = arith.constant 0 : index
    %c0_21 = arith.constant 0 : index
    %55 = vector.load %arg5[%c0_20, %c0_21] : memref<1x128xf32, #tpu.memory_space<vmem>>, vector<1x128xf32>
    %56 = vector.broadcast %55 : vector<1x128xf32> to vector<8x128xf32>
    %57 = arith.addf %54, %56 : vector<8x128xf32>
    %cst_22 = arith.constant 0.000000e+00 : f32
    %58 = vector.broadcast %cst_22 : f32 to vector<8x128xf32>
    %59 = arith.maximumf %57, %58 : vector<8x128xf32>
    %60 = arith.truncf %59 : vector<8x128xf32> to vector<8x128xbf16>
    %c0_23 = arith.constant 0 : index
    %c0_24 = arith.constant 0 : index
    %61 = vector.load %arg6[%c0_23, %c0_24] : memref<128x128xbf16, #tpu.memory_space<vmem>>, vector<128x128xbf16>
    %cst_25 = arith.constant dense<0.000000e+00> : vector<8x128xf32>
    %62 = tpu.matmul %60, %61, %cst_25 {dimension_numbers = #tpu.dot_dimension_numbers<[1], [0], [0], [1], [0, 0, 1, 1], [], []>} : vector<8x128xbf16>, vector<128x128xbf16>, vector<8x128xf32> -> vector<8x128xf32>
    %c0_26 = arith.constant 0 : index
    %c0_27 = arith.constant 0 : index
    %63 = vector.load %arg7[%c0_26, %c0_27] : memref<1x128xf32, #tpu.memory_space<vmem>>, vector<1x128xf32>
    %64 = vector.broadcast %63 : vector<1x128xf32> to vector<8x128xf32>
    %65 = arith.addf %62, %64 : vector<8x128xf32>
    %cst_28 = arith.constant 0.000000e+00 : f32
    %66 = vector.broadcast %cst_28 : f32 to vector<8x128xf32>
    %67 = arith.maximumf %65, %66 : vector<8x128xf32>
    %68 = arith.truncf %67 : vector<8x128xf32> to vector<8x128xbf16>
    %c0_29 = arith.constant 0 : index
    %c0_30 = arith.constant 0 : index
    %69 = vector.load %arg8[%c0_29, %c0_30] : memref<128x128xbf16, #tpu.memory_space<vmem>>, vector<128x128xbf16>
    %cst_31 = arith.constant dense<0.000000e+00> : vector<8x128xf32>
    %70 = tpu.matmul %68, %69, %cst_31 {dimension_numbers = #tpu.dot_dimension_numbers<[1], [0], [0], [1], [0, 0, 1, 1], [], []>} : vector<8x128xbf16>, vector<128x128xbf16>, vector<8x128xf32> -> vector<8x128xf32>
    %c0_32 = arith.constant 0 : index
    %c0_33 = arith.constant 0 : index
    %71 = vector.load %arg9[%c0_32, %c0_33] : memref<1x128xf32, #tpu.memory_space<vmem>>, vector<1x128xf32>
    %72 = vector.broadcast %71 : vector<1x128xf32> to vector<8x128xf32>
    %73 = arith.addf %70, %72 : vector<8x128xf32>
    %c0_34 = arith.constant 0 : index
    %c0_35 = arith.constant 0 : index
    %74 = vector.load %arg10[%c0_34, %c0_35] : memref<8x128xf32, #tpu.memory_space<vmem>>, vector<8x128xf32>
    tpu.vector_store %arg10[%c0_34, %c0_35], %73 {strides = array<i32>} : memref<8x128xf32, #tpu.memory_space<vmem>>, vector<8x128xf32>,
    return
  }
  func.func @transform_0(%arg0: i32) -> (i32, i32, i32) {
    %c0_i32 = arith.constant 0 : i32
    %c0_i32_0 = arith.constant 0 : i32
    %c0_i32_1 = arith.constant 0 : i32
    return %arg0, %c0_i32, %c0_i32_0 : i32, i32, i32
  }
  func.func @transform_1(%arg0: i32) -> (i32, i32) {
    %c0_i32 = arith.constant 0 : i32
    %c0_i32_0 = arith.constant 0 : i32
    %c0_i32_1 = arith.constant 0 : i32
    return %c0_i32, %c0_i32_0 : i32, i32
  }
  func.func @transform_2(%arg0: i32) -> (i32, i32) {
    %c0_i32 = arith.constant 0 : i32
    %c0_i32_0 = arith.constant 0 : i32
    %c0_i32_1 = arith.constant 0 : i32
    return %c0_i32, %c0_i32_0 : i32, i32
  }
  func.func @transform_3(%arg0: i32) -> (i32, i32) {
    %c0_i32 = arith.constant 0 : i32
    %c0_i32_0 = arith.constant 0 : i32
    %c0_i32_1 = arith.constant 0 : i32
    return %c0_i32, %c0_i32_0 : i32, i32
  }
  func.func @transform_4(%arg0: i32) -> (i32, i32) {
    %c0_i32 = arith.constant 0 : i32
    %c0_i32_0 = arith.constant 0 : i32
    %c0_i32_1 = arith.constant 0 : i32
    return %c0_i32, %c0_i32_0 : i32, i32
  }
  func.func @transform_5(%arg0: i32) -> (i32, i32) {
    %c0_i32 = arith.constant 0 : i32
    %c0_i32_0 = arith.constant 0 : i32
    %c0_i32_1 = arith.constant 0 : i32
    return %c0_i32, %c0_i32_0 : i32, i32
  }
  func.func @transform_6(%arg0: i32) -> (i32, i32) {
    %c0_i32 = arith.constant 0 : i32
    %c0_i32_0 = arith.constant 0 : i32
    %c0_i32_1 = arith.constant 0 : i32
    return %c0_i32, %c0_i32_0 : i32, i32
  }
  func.func @transform_7(%arg0: i32) -> (i32, i32) {
    %c0_i32 = arith.constant 0 : i32
    %c0_i32_0 = arith.constant 0 : i32
    %c0_i32_1 = arith.constant 0 : i32
    return %c0_i32, %c0_i32_0 : i32, i32
  }
  func.func @transform_8(%arg0: i32) -> (i32, i32) {
    %c0_i32 = arith.constant 0 : i32
    %c0_i32_0 = arith.constant 0 : i32
    %c0_i32_1 = arith.constant 0 : i32
    return %c0_i32, %c0_i32_0 : i32, i32
  }
  func.func @transform_9(%arg0: i32) -> (i32, i32) {
    %c0_i32 = arith.constant 0 : i32
    %c0_i32_0 = arith.constant 0 : i32
    return %arg0, %c0_i32 : i32, i32
  }
}

</mosaic_0001>

<llo_original>
// kernel: tpu_custom_call.1
$region0: #{tpu_custom_call.1}
  #allocation0 [shape = 'u32[]', space=smem, size = 0x4, offset = 0x4, fixed_abs, tag = 'smem constant byte address 0x4 - core index']
  #allocation1 [shape = 'u32[72,128]{1,0:T(1,128)}', space=vmem, size = 0x9000, scoped, tag = 'internal scratch']
  %s0 = inlined_call_operand.vmem [shape: bf16[8,19,32], index: 0, kind: input, shape index: {}]
  %s1 = inlined_call_operand.vmem [shape: bf16[128,128], index: 1, kind: input, shape index: {}]
  %s2 = inlined_call_operand.vmem [shape: f32[1,128], index: 2, kind: input, shape index: {}]
  %s3 = inlined_call_operand.vmem [shape: bf16[128,128], index: 3, kind: input, shape index: {}]
  %s4 = inlined_call_operand.vmem [shape: f32[1,128], index: 4, kind: input, shape index: {}]
  %s5 = inlined_call_operand.hbm [shape: bf16[128,128], index: 5, kind: input, shape index: {}]
  %s6 = inlined_call_operand.vmem [shape: f32[1,128], index: 6, kind: input, shape index: {}]
  %s7 = inlined_call_operand.hbm [shape: bf16[128,128], index: 7, kind: input, shape index: {}]
  %s8 = inlined_call_operand.vmem [shape: f32[1,128], index: 8, kind: input, shape index: {}]
  %s9 = inlined_call_operand.hbm [shape: f32[8,128], index: 9, kind: output, shape index: {}]
  %s10 = sld [smem:[#allocation0]]
  $region54: #{tpu_custom_call.1} parent=0
    _
  %s12 = ssub.s32 1, %s10
  %s13 = scalar_select 0, %s12, %s10
  $region1: #{tpu_custom_call.1} parent=0
    #allocation2 [shape = 'u8[32768]{0}', space=vmem, size = 0x8000, scoped, tag = 'input window, operand 5, single buffered']
    #allocation3 [shape = 's32[1]{0}', space=sflag, size = 0x4, scoped, tag = 'scoped memory for tpu_custom_call.1']
    #allocation4 [shape = 's32[1]{0}', space=sflag, size = 0x4, scoped, tag = 'scoped memory for tpu_custom_call.1']
    #allocation5 [shape = 'u8[32768]{0}', space=vmem, size = 0x8000, scoped, tag = 'input window, operand 7, single buffered']
    #allocation6 [shape = 's32[1]{0}', space=sflag, size = 0x4, scoped, tag = 'scoped memory for tpu_custom_call.1']
    #allocation7 [shape = 'u8[4096]{0}', space=vmem, size = 0x1000, scoped, tag = 'output window, operand 0, single buffered']
    %14 = vsyncpa [#allocation3], 0
    %15 = vsyncpa [#allocation6], 0
    %16 = vsyncpa [#allocation4], 0
    // Predicated region
    $region2: #{tpu_custom_call.1} parent=1 // pred_check
      _
    $region3: #{tpu_custom_call.1} parent=1 // pred_check_branch
      %18 = sbr.rel (0) target = $region5
    $region4: #{tpu_custom_call.1} parent=1 // pred_region
      _
    $region5: #{tpu_custom_call.1} parent=1 // pred_fallthru
      _
    // Predicated region
    $region6: #{tpu_custom_call.1} parent=1 // pred_check
      _
    $region7: #{tpu_custom_call.1} parent=1 // pred_check_branch
      %20 = sbr.rel (0) target = $region9
    $region8: #{tpu_custom_call.1} parent=1 // pred_region
      _
    $region9: #{tpu_custom_call.1} parent=1 // pred_fallthru
      _
    // Predicated region
    $region10: #{tpu_custom_call.1} parent=1 // pred_check
      _
    $region11: #{tpu_custom_call.1} parent=1 // pred_check_branch
      %22 = sbr.rel (0) target = $region13
    $region12: #{tpu_custom_call.1} parent=1 // pred_region
      _
    $region13: #{tpu_custom_call.1} parent=1 // pred_fallthru
      _
    // Predicated region
    $region14: #{tpu_custom_call.1} parent=1 // pred_check
      _
    $region15: #{tpu_custom_call.1} parent=1 // pred_check_branch
      %24 = sbr.rel (0) target = $region17
    $region16: #{tpu_custom_call.1} parent=1 // pred_region
      _
    $region17: #{tpu_custom_call.1} parent=1 // pred_fallthru
      _
    // Predicated region
    $region18: #{tpu_custom_call.1} parent=1 // pred_check
      _
    $region19: #{tpu_custom_call.1} parent=1 // pred_check_branch
      %26 = sbr.rel (0) target = $region21
    $region20: #{tpu_custom_call.1} parent=1 // pred_region
      _
    $region21: #{tpu_custom_call.1} parent=1 // pred_fallthru
      _
    // Predicated region
    $region22: #{tpu_custom_call.1} parent=1 // pred_check
      _
    $region23: #{tpu_custom_call.1} parent=1 // pred_check_branch
      %28 = sbr.rel (0) target = $region25
    $region24: #{tpu_custom_call.1} parent=1 // pred_region
      %30 = vsyncadd [#allocation3], 0
      %s31 = sshll.u32 %s5, 4
      %s32 = int_to_ptr.hbm [resolvable:$true] %s31
      %s33 = sshll.u32 [#allocation2], 4
      %s34 = int_to_ptr.vmem [resolvable:$true] %s33
      %39 = dma.hbm_to_vmem [thread:$0]  %s32, 1024, %s34, [#allocation3], 64, 64, 4
    $region25: #{tpu_custom_call.1} parent=1 // pred_fallthru
      _
    // Predicated region
    $region26: #{tpu_custom_call.1} parent=1 // pred_check
      _
    $region27: #{tpu_custom_call.1} parent=1 // pred_check_branch
      %41 = sbr.rel (0) target = $region29
    $region28: #{tpu_custom_call.1} parent=1 // pred_region
      _
    $region29: #{tpu_custom_call.1} parent=1 // pred_fallthru
      _
    // Predicated region
    $region30: #{tpu_custom_call.1} parent=1 // pred_check
      _
    $region31: #{tpu_custom_call.1} parent=1 // pred_check_branch
      %43 = sbr.rel (0) target = $region33
    $region32: #{tpu_custom_call.1} parent=1 // pred_region
      %45 = vsyncadd [#allocation6], 0
      %s46 = sshll.u32 %s7, 4
      %s47 = int_to_ptr.hbm [resolvable:$true] %s46
      %s48 = sshll.u32 [#allocation5], 4
      %s49 = int_to_ptr.vmem [resolvable:$true] %s48
      %54 = dma.hbm_to_vmem [thread:$0]  %s47, 1024, %s49, [#allocation6], 64, 64, 4
    $region33: #{tpu_custom_call.1} parent=1 // pred_fallthru
      _
    // Predicated region
    $region34: #{tpu_custom_call.1} parent=1 // pred_check
      _
    $region35: #{tpu_custom_call.1} parent=1 // pred_check_branch
      %56 = sbr.rel (0) target = $region37
    $region36: #{tpu_custom_call.1} parent=1 // pred_region
      _
    $region37: #{tpu_custom_call.1} parent=1 // pred_fallthru
      _
    // Predicated region
    $region38: #{tpu_custom_call.1} parent=1 // pred_check
      _
    $region39: #{tpu_custom_call.1} parent=1 // pred_check_branch
      %58 = sbr.rel (0) target = $region41
    $region40: #{tpu_custom_call.1} parent=1 // pred_region
      %60 = dma.done [#allocation3], 1024
    $region41: #{tpu_custom_call.1} parent=1 // pred_fallthru
      _
    // Predicated region
    $region42: #{tpu_custom_call.1} parent=1 // pred_check
      _
    $region43: #{tpu_custom_call.1} parent=1 // pred_check_branch
      %62 = sbr.rel (0) target = $region45
    $region44: #{tpu_custom_call.1} parent=1 // pred_region
      %64 = dma.done [#allocation6], 1024
    $region45: #{tpu_custom_call.1} parent=1 // pred_fallthru
      _
    %v66 = vld [vmem:[%s1] sm:$0xf]
    %v67 = vld [vmem:[%s1 + $0x4] sm:$0xf]
    %v68 = vld [vmem:[%s1 + $0x8] sm:$0xf]
    %v69 = vld [vmem:[%s1 + $0xc] sm:$0xf]
    %v70 = vld [vmem:[%s1 + $0x10] sm:$0xf]
    %v71 = vld [vmem:[%s1 + $0x14] sm:$0xf]
    %v72 = vld [vmem:[%s1 + $0x18] sm:$0xf]
    %v73 = vld [vmem:[%s1 + $0x1c] sm:$0xf]
    %v74 = vld [vmem:[%s1 + $0x20] sm:$0xf]
    %v75 = vld [vmem:[%s1 + $0x24] sm:$0xf]
    %v76 = vld [vmem:[%s1 + $0x28] sm:$0xf]
    %v77 = vld [vmem:[%s1 + $0x2c] sm:$0xf]
    %v78 = vld [vmem:[%s1 + $0x30] sm:$0xf]
    %v79 = vld [vmem:[%s1 + $0x34] sm:$0xf]
    %v80 = vld [vmem:[%s1 + $0x38] sm:$0xf]
    %v81 = vld [vmem:[%s1 + $0x3c] sm:$0xf]
    %v82 = vld [vmem:[%s0] sm:$0xf]
    %v83 = vld [vmem:[%s0 + $0x4] sm:$0xf]
    %v84 = vld [vmem:[%s0 + $0x8] sm:$0x3]
    %v85 = vld [vmem:[%s0 + $0xc] sm:$0xf]
    %v86 = vld [vmem:[%s0 + $0x10] sm:$0xf]
    %v87 = vld [vmem:[%s0 + $0x14] sm:$0x3]
    %v88 = vld [vmem:[%s0 + $0x18] sm:$0xf]
    %v89 = vld [vmem:[%s0 + $0x1c] sm:$0xf]
    %v90 = vld [vmem:[%s0 + $0x20] sm:$0x3]
    %v91 = vld [vmem:[%s0 + $0x24] sm:$0xf]
    %v92 = vld [vmem:[%s0 + $0x28] sm:$0xf]
    %v93 = vld [vmem:[%s0 + $0x2c] sm:$0x3]
    %v94 = vld [vmem:[%s0 + $0x30] sm:$0xf]
    %v95 = vld [vmem:[%s0 + $0x34] sm:$0xf]
    %v96 = vld [vmem:[%s0 + $0x38] sm:$0x3]
    %v97 = vld [vmem:[%s0 + $0x3c] sm:$0xf]
    %v98 = vld [vmem:[%s0 + $0x40] sm:$0xf]
    %v99 = vld [vmem:[%s0 + $0x44] sm:$0x3]
    %v100 = vld [vmem:[%s0 + $0x48] sm:$0xf]
    %v101 = vld [vmem:[%s0 + $0x4c] sm:$0xf]
    %v102 = vld [vmem:[%s0 + $0x50] sm:$0x3]
    %v103 = vld [vmem:[%s0 + $0x54] sm:$0xf]
    %v104 = vld [vmem:[%s0 + $0x58] sm:$0xf]
    %v105 = vld [vmem:[%s0 + $0x5c] sm:$0x3]
    %vm106 = vsmask.f32 3328
    %vm107 = vsmask.f32 7440
    %vm108 = vmor %vm106, %vm107
    %v110 = vshrl.u32 %v82, 16
    %v112 = vrot.slane %v110, 4
    %v113 = vshll.u32 %v82, 16
    %v115 = vrot.slane %v113, 5
    %v116 = vor.u32 %v112, %v115
    %v117 = vrot.slane %v116, 4
    %v119 = vshll.u32 %v83, 16
    %v121 = vrot.slane %v119, 5
    %v122 = vsel %vm108, %v117, %v121
    %v123 = vshrl.u32 %v83, 16
    %v125 = vrot.slane %v123, 4
    %v126 = vor.u32 %v125, %v121
    %v127 = vrot.slane %v126, 4
    %v129 = vshll.u32 %v84, 16
    %v131 = vrot.slane %v129, 5
    %v132 = vsel %vm108, %v127, %v131
    %v134 = vshrl.u32 %v85, 16
    %v136 = vrot.slane %v134, 4
    %v137 = vshll.u32 %v85, 16
    %v139 = vrot.slane %v137, 5
    %v140 = vor.u32 %v136, %v139
    %v141 = vrot.slane %v140, 4
    %v143 = vshll.u32 %v86, 16
    %v145 = vrot.slane %v143, 5
    %v146 = vsel %vm108, %v141, %v145
    %v147 = vshrl.u32 %v86, 16
    %v149 = vrot.slane %v147, 4
    %v150 = vor.u32 %v149, %v145
    %v151 = vrot.slane %v150, 4
    %v153 = vshll.u32 %v87, 16
    %v155 = vrot.slane %v153, 5
    %v156 = vsel %vm108, %v151, %v155
    %v158 = vshrl.u32 %v88, 16
    %v160 = vrot.slane %v158, 4
    %v161 = vshll.u32 %v88, 16
    %v163 = vrot.slane %v161, 5
    %v164 = vor.u32 %v160, %v163
    %v165 = vrot.slane %v164, 4
    %v167 = vshll.u32 %v89, 16
    %v169 = vrot.slane %v167, 5
    %v170 = vsel %vm108, %v165, %v169
    %v171 = vshrl.u32 %v89, 16
    %v173 = vrot.slane %v171, 4
    %v174 = vor.u32 %v173, %v169
    %v175 = vrot.slane %v174, 4
    %v177 = vshll.u32 %v90, 16
    %v179 = vrot.slane %v177, 5
    %v180 = vsel %vm108, %v175, %v179
    %v182 = vshrl.u32 %v91, 16
    %v184 = vrot.slane %v182, 4
    %v185 = vshll.u32 %v91, 16
    %v187 = vrot.slane %v185, 5
    %v188 = vor.u32 %v184, %v187
    %v189 = vrot.slane %v188, 4
    %v191 = vshll.u32 %v92, 16
    %v193 = vrot.slane %v191, 5
    %v194 = vsel %vm108, %v189, %v193
    %v195 = vshrl.u32 %v92, 16
    %v197 = vrot.slane %v195, 4
    %v198 = vor.u32 %v197, %v193
    %v199 = vrot.slane %v198, 4
    %v201 = vshll.u32 %v93, 16
    %v203 = vrot.slane %v201, 5
    %v204 = vsel %vm108, %v199, %v203
    %v206 = vshrl.u32 %v94, 16
    %v208 = vrot.slane %v206, 4
    %v209 = vshll.u32 %v94, 16
    %v211 = vrot.slane %v209, 5
    %v212 = vor.u32 %v208, %v211
    %v213 = vrot.slane %v212, 4
    %v215 = vshll.u32 %v95, 16
    %v217 = vrot.slane %v215, 5
    %v218 = vsel %vm108, %v213, %v217
    %v219 = vshrl.u32 %v95, 16
    %v221 = vrot.slane %v219, 4
    %v222 = vor.u32 %v221, %v217
    %v223 = vrot.slane %v222, 4
    %v225 = vshll.u32 %v96, 16
    %v227 = vrot.slane %v225, 5
    %v228 = vsel %vm108, %v223, %v227
    %v230 = vshrl.u32 %v97, 16
    %v232 = vrot.slane %v230, 4
    %v233 = vshll.u32 %v97, 16
    %v235 = vrot.slane %v233, 5
    %v236 = vor.u32 %v232, %v235
    %v237 = vrot.slane %v236, 4
    %v239 = vshll.u32 %v98, 16
    %v241 = vrot.slane %v239, 5
    %v242 = vsel %vm108, %v237, %v241
    %v243 = vshrl.u32 %v98, 16
    %v245 = vrot.slane %v243, 4
    %v246 = vor.u32 %v245, %v241
    %v247 = vrot.slane %v246, 4
    %v249 = vshll.u32 %v99, 16
    %v251 = vrot.slane %v249, 5
    %v252 = vsel %vm108, %v247, %v251
    %v254 = vshrl.u32 %v100, 16
    %v256 = vrot.slane %v254, 4
    %v257 = vshll.u32 %v100, 16
    %v259 = vrot.slane %v257, 5
    %v260 = vor.u32 %v256, %v259
    %v261 = vrot.slane %v260, 4
    %v263 = vshll.u32 %v101, 16
    %v265 = vrot.slane %v263, 5
    %v266 = vsel %vm108, %v261, %v265
    %v267 = vshrl.u32 %v101, 16
    %v269 = vrot.slane %v267, 4
    %v270 = vor.u32 %v269, %v265
    %v271 = vrot.slane %v270, 4
    %v273 = vshll.u32 %v102, 16
    %v275 = vrot.slane %v273, 5
    %v276 = vsel %vm108, %v271, %v275
    %v278 = vshrl.u32 %v103, 16
    %v280 = vrot.slane %v278, 4
    %v281 = vshll.u32 %v103, 16
    %v283 = vrot.slane %v281, 5
    %v284 = vor.u32 %v280, %v283
    %v285 = vrot.slane %v284, 4
    %v287 = vshll.u32 %v104, 16
    %v289 = vrot.slane %v287, 5
    %v290 = vsel %vm108, %v285, %v289
    %v291 = vshrl.u32 %v104, 16
    %v293 = vrot.slane %v291, 4
    %v294 = vor.u32 %v293, %v289
    %v295 = vrot.slane %v294, 4
    %v297 = vshll.u32 %v105, 16
    %v299 = vrot.slane %v297, 5
    %v300 = vsel %vm108, %v295, %v299
    %v301 = vunpack.c.l.b16 %v122
    %v302 = vunpack.c.l.b16 %v132
    %v303 = vunpack.c.l.b16 %v146
    %v304 = vunpack.c.l.b16 %v156
    %v305 = vunpack.c.l.b16 %v170
    %v306 = vunpack.c.l.b16 %v180
    %v307 = vunpack.c.l.b16 %v194
    %v308 = vunpack.c.l.b16 %v204
    %v309 = vunpack.c.l.b16 %v218
    %v310 = vunpack.c.l.b16 %v228
    %v311 = vunpack.c.l.b16 %v242
    %v312 = vunpack.c.l.b16 %v252
    %v313 = vunpack.c.l.b16 %v266
    %v314 = vunpack.c.l.b16 %v276
    %v315 = vunpack.c.l.b16 %v290
    %v316 = vunpack.c.l.b16 %v300
    %v317 = vpack.c.b16 %v302, %v301
    %v318 = vpack.c.b16 %v304, %v303
    %v319 = vpack.c.b16 %v306, %v305
    %v320 = vpack.c.b16 %v308, %v307
    %v321 = vpack.c.b16 %v310, %v309
    %v322 = vpack.c.b16 %v312, %v311
    %v323 = vpack.c.b16 %v314, %v313
    %v324 = vpack.c.b16 %v316, %v315
    %v329 = vunpack.c.l.b16 %v70
    %v330 = vunpack.c.l.b16 %v71
    %v331 = vunpack.c.l.b16 %v72
    %v332 = vunpack.c.l.b16 %v73
    %v333 = vpack.c.b16 %v330, %v329
    %v334 = vpack.c.b16 %v332, %v331
    %vm337 = vcmask 261120
    %v339 = vsel %vm337, %v317, 0
    %v342 = vsel %vm337, %v318, 0
    %v345 = vsel %vm337, %v319, 0
    %v348 = vsel %vm337, %v320, 0
    %v351 = vsel %vm337, %v321, 0
    %v354 = vsel %vm337, %v322, 0
    %v357 = vsel %vm337, %v323, 0
    %v360 = vsel %vm337, %v324, 0
    %362 = vmatpush.bf16.msra.mxu0 0
    %363 = vmatpush.bf16.msra.mxu0 0
    %364 = vmatpush.bf16.msra.mxu0 0
    %365 = vmatpush.bf16.msra.mxu0 0
    %366 = vmatpush.bf16.msra.mxu0 0
    %367 = vmatpush.bf16.msra.mxu0 0
    %368 = vmatpush.bf16.msra.mxu0 %v334
    %369 = vmatpush.bf16.msra.mxu0 %v333
    %370 = vmatmul.bf16.gmra.mxu0 %v339
    %v371 = vpop.f32.mrf.mxu0
    %v372 = vadd.f32 0.0, %v371
    %v373 = vpop.f32.mrf.mxu0
    %v374 = vadd.f32 0.0, %v373
    %375 = vmatmul.bf16.gmra.mxu0 %v342
    %v376 = vpop.f32.mrf.mxu0
    %v377 = vadd.f32 0.0, %v376
    %v378 = vpop.f32.mrf.mxu0
    %v379 = vadd.f32 0.0, %v378
    %380 = vmatmul.bf16.gmra.mxu0 %v345
    %v381 = vpop.f32.mrf.mxu0
    %v382 = vadd.f32 0.0, %v381
    %v383 = vpop.f32.mrf.mxu0
    %v384 = vadd.f32 0.0, %v383
    %385 = vmatmul.bf16.gmra.mxu0 %v348
    %v386 = vpop.f32.mrf.mxu0
    %v387 = vadd.f32 0.0, %v386
    %v388 = vpop.f32.mrf.mxu0
    %v389 = vadd.f32 0.0, %v388
    %390 = vmatmul.bf16.gmra.mxu0 %v351
    %v391 = vpop.f32.mrf.mxu0
    %v392 = vadd.f32 0.0, %v391
    %v393 = vpop.f32.mrf.mxu0
    %v394 = vadd.f32 0.0, %v393
    %395 = vmatmul.bf16.gmra.mxu0 %v354
    %v396 = vpop.f32.mrf.mxu0
    %v397 = vadd.f32 0.0, %v396
    %v398 = vpop.f32.mrf.mxu0
    %v399 = vadd.f32 0.0, %v398
    %400 = vmatmul.bf16.gmra.mxu0 %v357
    %v401 = vpop.f32.mrf.mxu0
    %v402 = vadd.f32 0.0, %v401
    %v403 = vpop.f32.mrf.mxu0
    %v404 = vadd.f32 0.0, %v403
    %405 = vmatmul.bf16.gmra.mxu0 %v360
    %v406 = vpop.f32.mrf.mxu0
    %v407 = vadd.f32 0.0, %v406
    %v408 = vpop.f32.mrf.mxu0
    %v409 = vadd.f32 0.0, %v408
    %410 = vdwg.mxu0
    %v427 = vunpack.c.l.b16 %v82
    %v428 = vunpack.c.l.b16 %v83
    %v429 = vunpack.c.l.b16 %v85
    %v430 = vunpack.c.l.b16 %v86
    %v431 = vunpack.c.l.b16 %v88
    %v432 = vunpack.c.l.b16 %v89
    %v433 = vunpack.c.l.b16 %v91
    %v434 = vunpack.c.l.b16 %v92
    %v435 = vunpack.c.l.b16 %v94
    %v436 = vunpack.c.l.b16 %v95
    %v437 = vunpack.c.l.b16 %v97
    %v438 = vunpack.c.l.b16 %v98
    %v439 = vunpack.c.l.b16 %v100
    %v440 = vunpack.c.l.b16 %v101
    %v441 = vunpack.c.l.b16 %v103
    %v442 = vunpack.c.l.b16 %v104
    %v443 = vpack.c.b16 %v428, %v427
    %v444 = vpack.c.b16 %v430, %v429
    %v445 = vpack.c.b16 %v432, %v431
    %v446 = vpack.c.b16 %v434, %v433
    %v447 = vpack.c.b16 %v436, %v435
    %v448 = vpack.c.b16 %v438, %v437
    %v449 = vpack.c.b16 %v440, %v439
    %v450 = vpack.c.b16 %v442, %v441
    %v455 = vunpack.c.l.b16 %v66
    %v456 = vunpack.c.l.b16 %v67
    %v457 = vunpack.c.l.b16 %v68
    %v458 = vunpack.c.l.b16 %v69
    %v459 = vpack.c.b16 %v456, %v455
    %v460 = vpack.c.b16 %v458, %v457
    %v464 = vsel %vm337, %v443, 0
    %v467 = vsel %vm337, %v444, 0
    %v470 = vsel %vm337, %v445, 0
    %v473 = vsel %vm337, %v446, 0
    %v476 = vsel %vm337, %v447, 0
    %v479 = vsel %vm337, %v448, 0
    %v482 = vsel %vm337, %v449, 0
    %v485 = vsel %vm337, %v450, 0
    %487 = vmatpush.bf16.msra.mxu0 0
    %488 = vmatpush.bf16.msra.mxu0 0
    %489 = vmatpush.bf16.msra.mxu0 0
    %490 = vmatpush.bf16.msra.mxu0 0
    %491 = vmatpush.bf16.msra.mxu0 0
    %492 = vmatpush.bf16.msra.mxu0 0
    %493 = vmatpush.bf16.msra.mxu0 %v460
    %494 = vmatpush.bf16.msra.mxu0 %v459
    %495 = vmatmul.bf16.gmra.mxu0 %v464
    %v496 = vpop.f32.mrf.mxu0
    %v497 = vadd.f32 %v372, %v496
    %v498 = vpop.f32.mrf.mxu0
    %v499 = vadd.f32 %v374, %v498
    %500 = vmatmul.bf16.gmra.mxu0 %v467
    %v501 = vpop.f32.mrf.mxu0
    %v502 = vadd.f32 %v377, %v501
    %v503 = vpop.f32.mrf.mxu0
    %v504 = vadd.f32 %v379, %v503
    %505 = vmatmul.bf16.gmra.mxu0 %v470
    %v506 = vpop.f32.mrf.mxu0
    %v507 = vadd.f32 %v382, %v506
    %v508 = vpop.f32.mrf.mxu0
    %v509 = vadd.f32 %v384, %v508
    %510 = vmatmul.bf16.gmra.mxu0 %v473
    %v511 = vpop.f32.mrf.mxu0
    %v512 = vadd.f32 %v387, %v511
    %v513 = vpop.f32.mrf.mxu0
    %v514 = vadd.f32 %v389, %v513
    %515 = vmatmul.bf16.gmra.mxu0 %v476
    %v516 = vpop.f32.mrf.mxu0
    %v517 = vadd.f32 %v392, %v516
    %v518 = vpop.f32.mrf.mxu0
    %v519 = vadd.f32 %v394, %v518
    %520 = vmatmul.bf16.gmra.mxu0 %v479
    %v521 = vpop.f32.mrf.mxu0
    %v522 = vadd.f32 %v397, %v521
    %v523 = vpop.f32.mrf.mxu0
    %v524 = vadd.f32 %v399, %v523
    %525 = vmatmul.bf16.gmra.mxu0 %v482
    %v526 = vpop.f32.mrf.mxu0
    %v527 = vadd.f32 %v402, %v526
    %v528 = vpop.f32.mrf.mxu0
    %v529 = vadd.f32 %v404, %v528
    %530 = vmatmul.bf16.gmra.mxu0 %v485
    %v531 = vpop.f32.mrf.mxu0
    %v532 = vadd.f32 %v407, %v531
    %v533 = vpop.f32.mrf.mxu0
    %v534 = vadd.f32 %v409, %v533
    %535 = vdwg.mxu0
    %vm544 = vcmask 1042432
    %vm545 = vcmask 1046532
    %vm546 = vmor %vm544, %vm545
    %v547 = vrot.slane %v82, 5
    %v548 = vrot.slane %v547, 4
    %v549 = vrot.slane %v83, 5
    %v550 = vsel %vm546, %v548, %v549
    %v551 = vrot.slane %v549, 4
    %v552 = vrot.slane %v84, 5
    %v553 = vsel %vm546, %v551, %v552
    %v554 = vrot.slane %v85, 5
    %v555 = vrot.slane %v554, 4
    %v556 = vrot.slane %v86, 5
    %v557 = vsel %vm546, %v555, %v556
    %v558 = vrot.slane %v556, 4
    %v559 = vrot.slane %v87, 5
    %v560 = vsel %vm546, %v558, %v559
    %v561 = vrot.slane %v88, 5
    %v562 = vrot.slane %v561, 4
    %v563 = vrot.slane %v89, 5
    %v564 = vsel %vm546, %v562, %v563
    %v565 = vrot.slane %v563, 4
    %v566 = vrot.slane %v90, 5
    %v567 = vsel %vm546, %v565, %v566
    %v568 = vrot.slane %v91, 5
    %v569 = vrot.slane %v568, 4
    %v570 = vrot.slane %v92, 5
    %v571 = vsel %vm546, %v569, %v570
    %v572 = vrot.slane %v570, 4
    %v573 = vrot.slane %v93, 5
    %v574 = vsel %vm546, %v572, %v573
    %v575 = vrot.slane %v94, 5
    %v576 = vrot.slane %v575, 4
    %v577 = vrot.slane %v95, 5
    %v578 = vsel %vm546, %v576, %v577
    %v579 = vrot.slane %v577, 4
    %v580 = vrot.slane %v96, 5
    %v581 = vsel %vm546, %v579, %v580
    %v582 = vrot.slane %v97, 5
    %v583 = vrot.slane %v582, 4
    %v584 = vrot.slane %v98, 5
    %v585 = vsel %vm546, %v583, %v584
    %v586 = vrot.slane %v584, 4
    %v587 = vrot.slane %v99, 5
    %v588 = vsel %vm546, %v586, %v587
    %v589 = vrot.slane %v100, 5
    %v590 = vrot.slane %v589, 4
    %v591 = vrot.slane %v101, 5
    %v592 = vsel %vm546, %v590, %v591
    %v593 = vrot.slane %v591, 4
    %v594 = vrot.slane %v102, 5
    %v595 = vsel %vm546, %v593, %v594
    %v596 = vrot.slane %v103, 5
    %v597 = vrot.slane %v596, 4
    %v598 = vrot.slane %v104, 5
    %v599 = vsel %vm546, %v597, %v598
    %v600 = vrot.slane %v598, 4
    %v601 = vrot.slane %v105, 5
    %v602 = vsel %vm546, %v600, %v601
    %v603 = vunpack.c.l.b16 %v550
    %v604 = vunpack.c.l.b16 %v553
    %v605 = vunpack.c.l.b16 %v557
    %v606 = vunpack.c.l.b16 %v560
    %v607 = vunpack.c.l.b16 %v564
    %v608 = vunpack.c.l.b16 %v567
    %v609 = vunpack.c.l.b16 %v571
    %v610 = vunpack.c.l.b16 %v574
    %v611 = vunpack.c.l.b16 %v578
    %v612 = vunpack.c.l.b16 %v581
    %v613 = vunpack.c.l.b16 %v585
    %v614 = vunpack.c.l.b16 %v588
    %v615 = vunpack.c.l.b16 %v592
    %v616 = vunpack.c.l.b16 %v595
    %v617 = vunpack.c.l.b16 %v599
    %v618 = vunpack.c.l.b16 %v602
    %v619 = vpack.c.b16 %v604, %v603
    %v620 = vpack.c.b16 %v606, %v605
    %v621 = vpack.c.b16 %v608, %v607
    %v622 = vpack.c.b16 %v610, %v609
    %v623 = vpack.c.b16 %v612, %v611
    %v624 = vpack.c.b16 %v614, %v613
    %v625 = vpack.c.b16 %v616, %v615
    %v626 = vpack.c.b16 %v618, %v617
    %v631 = vunpack.c.l.b16 %v74
    %v632 = vunpack.c.l.b16 %v75
    %v633 = vunpack.c.l.b16 %v76
    %v634 = vunpack.c.l.b16 %v77
    %v635 = vpack.c.b16 %v632, %v631
    %v636 = vpack.c.b16 %v634, %v633
    %v640 = vsel %vm337, %v619, 0
    %v643 = vsel %vm337, %v620, 0
    %v646 = vsel %vm337, %v621, 0
    %v649 = vsel %vm337, %v622, 0
    %v652 = vsel %vm337, %v623, 0
    %v655 = vsel %vm337, %v624, 0
    %v658 = vsel %vm337, %v625, 0
    %v661 = vsel %vm337, %v626, 0
    %663 = vmatpush.bf16.msra.mxu0 0
    %664 = vmatpush.bf16.msra.mxu0 0
    %665 = vmatpush.bf16.msra.mxu0 0
    %666 = vmatpush.bf16.msra.mxu0 0
    %667 = vmatpush.bf16.msra.mxu0 0
    %668 = vmatpush.bf16.msra.mxu0 0
    %669 = vmatpush.bf16.msra.mxu0 %v636
    %670 = vmatpush.bf16.msra.mxu0 %v635
    %671 = vmatmul.bf16.gmra.mxu0 %v640
    %v672 = vpop.f32.mrf.mxu0
    %v673 = vadd.f32 0.0, %v672
    %v674 = vpop.f32.mrf.mxu0
    %v675 = vadd.f32 0.0, %v674
    %676 = vmatmul.bf16.gmra.mxu0 %v643
    %v677 = vpop.f32.mrf.mxu0
    %v678 = vadd.f32 0.0, %v677
    %v679 = vpop.f32.mrf.mxu0
    %v680 = vadd.f32 0.0, %v679
    %681 = vmatmul.bf16.gmra.mxu0 %v646
    %v682 = vpop.f32.mrf.mxu0
    %v683 = vadd.f32 0.0, %v682
    %v684 = vpop.f32.mrf.mxu0
    %v685 = vadd.f32 0.0, %v684
    %686 = vmatmul.bf16.gmra.mxu0 %v649
    %v687 = vpop.f32.mrf.mxu0
    %v688 = vadd.f32 0.0, %v687
    %v689 = vpop.f32.mrf.mxu0
    %v690 = vadd.f32 0.0, %v689
    %691 = vmatmul.bf16.gmra.mxu0 %v652
    %v692 = vpop.f32.mrf.mxu0
    %v693 = vadd.f32 0.0, %v692
    %v694 = vpop.f32.mrf.mxu0
    %v695 = vadd.f32 0.0, %v694
    %696 = vmatmul.bf16.gmra.mxu0 %v655
    %v697 = vpop.f32.mrf.mxu0
    %v698 = vadd.f32 0.0, %v697
    %v699 = vpop.f32.mrf.mxu0
    %v700 = vadd.f32 0.0, %v699
    %701 = vmatmul.bf16.gmra.mxu0 %v658
    %v702 = vpop.f32.mrf.mxu0
    %v703 = vadd.f32 0.0, %v702
    %v704 = vpop.f32.mrf.mxu0
    %v705 = vadd.f32 0.0, %v704
    %706 = vmatmul.bf16.gmra.mxu0 %v661
    %v707 = vpop.f32.mrf.mxu0
    %v708 = vadd.f32 0.0, %v707
    %v709 = vpop.f32.mrf.mxu0
    %v710 = vadd.f32 0.0, %v709
    %711 = vdwg.mxu0
    %v712 = vadd.f32 %v497, %v673
    %v713 = vadd.f32 %v499, %v675
    %v714 = vadd.f32 %v502, %v678
    %v715 = vadd.f32 %v504, %v680
    %v716 = vadd.f32 %v507, %v683
    %v717 = vadd.f32 %v509, %v685
    %v718 = vadd.f32 %v512, %v688
    %v719 = vadd.f32 %v514, %v690
    %v720 = vadd.f32 %v517, %v693
    %v721 = vadd.f32 %v519, %v695
    %v722 = vadd.f32 %v522, %v698
    %v723 = vadd.f32 %v524, %v700
    %v724 = vadd.f32 %v527, %v703
    %v725 = vadd.f32 %v529, %v705
    %v726 = vadd.f32 %v532, %v708
    %v727 = vadd.f32 %v534, %v710
    %vm728 = vsmask.f32 2304
    %vm729 = vsmask.f32 6416
    %vm730 = vmor %vm728, %vm729
    %v731 = vrot.slane %v110, 5
    %v732 = vrot.slane %v113, 6
    %v733 = vor.u32 %v731, %v732
    %v734 = vrot.slane %v733, 4
    %v735 = vrot.slane %v123, 5
    %v736 = vrot.slane %v119, 6
    %v737 = vor.u32 %v735, %v736
    %v738 = vsel %vm730, %v734, %v737
    %v739 = vrot.slane %v737, 4
    %v740 = vshrl.u32 %v84, 16
    %v742 = vrot.slane %v740, 5
    %v743 = vrot.slane %v129, 6
    %v744 = vor.u32 %v742, %v743
    %v745 = vsel %vm730, %v739, %v744
    %v746 = vrot.slane %v134, 5
    %v747 = vrot.slane %v137, 6
    %v748 = vor.u32 %v746, %v747
    %v749 = vrot.slane %v748, 4
    %v750 = vrot.slane %v147, 5
    %v751 = vrot.slane %v143, 6
    %v752 = vor.u32 %v750, %v751
    %v753 = vsel %vm730, %v749, %v752
    %v754 = vrot.slane %v752, 4
    %v755 = vshrl.u32 %v87, 16
    %v757 = vrot.slane %v755, 5
    %v758 = vrot.slane %v153, 6
    %v759 = vor.u32 %v757, %v758
    %v760 = vsel %vm730, %v754, %v759
    %v761 = vrot.slane %v158, 5
    %v762 = vrot.slane %v161, 6
    %v763 = vor.u32 %v761, %v762
    %v764 = vrot.slane %v763, 4
    %v765 = vrot.slane %v171, 5
    %v766 = vrot.slane %v167, 6
    %v767 = vor.u32 %v765, %v766
    %v768 = vsel %vm730, %v764, %v767
    %v769 = vrot.slane %v767, 4
    %v770 = vshrl.u32 %v90, 16
    %v772 = vrot.slane %v770, 5
    %v773 = vrot.slane %v177, 6
    %v774 = vor.u32 %v772, %v773
    %v775 = vsel %vm730, %v769, %v774
    %v776 = vrot.slane %v182, 5
    %v777 = vrot.slane %v185, 6
    %v778 = vor.u32 %v776, %v777
    %v779 = vrot.slane %v778, 4
    %v780 = vrot.slane %v195, 5
    %v781 = vrot.slane %v191, 6
    %v782 = vor.u32 %v780, %v781
    %v783 = vsel %vm730, %v779, %v782
    %v784 = vrot.slane %v782, 4
    %v785 = vshrl.u32 %v93, 16
    %v787 = vrot.slane %v785, 5
    %v788 = vrot.slane %v201, 6
    %v789 = vor.u32 %v787, %v788
    %v790 = vsel %vm730, %v784, %v789
    %v791 = vrot.slane %v206, 5
    %v792 = vrot.slane %v209, 6
    %v793 = vor.u32 %v791, %v792
    %v794 = vrot.slane %v793, 4
    %v795 = vrot.slane %v219, 5
    %v796 = vrot.slane %v215, 6
    %v797 = vor.u32 %v795, %v796
    %v798 = vsel %vm730, %v794, %v797
    %v799 = vrot.slane %v797, 4
    %v800 = vshrl.u32 %v96, 16
    %v802 = vrot.slane %v800, 5
    %v803 = vrot.slane %v225, 6
    %v804 = vor.u32 %v802, %v803
    %v805 = vsel %vm730, %v799, %v804
    %v806 = vrot.slane %v230, 5
    %v807 = vrot.slane %v233, 6
    %v808 = vor.u32 %v806, %v807
    %v809 = vrot.slane %v808, 4
    %v810 = vrot.slane %v243, 5
    %v811 = vrot.slane %v239, 6
    %v812 = vor.u32 %v810, %v811
    %v813 = vsel %vm730, %v809, %v812
    %v814 = vrot.slane %v812, 4
    %v815 = vshrl.u32 %v99, 16
    %v817 = vrot.slane %v815, 5
    %v818 = vrot.slane %v249, 6
    %v819 = vor.u32 %v817, %v818
    %v820 = vsel %vm730, %v814, %v819
    %v821 = vrot.slane %v254, 5
    %v822 = vrot.slane %v257, 6
    %v823 = vor.u32 %v821, %v822
    %v824 = vrot.slane %v823, 4
    %v825 = vrot.slane %v267, 5
    %v826 = vrot.slane %v263, 6
    %v827 = vor.u32 %v825, %v826
    %v828 = vsel %vm730, %v824, %v827
    %v829 = vrot.slane %v827, 4
    %v830 = vshrl.u32 %v102, 16
    %v832 = vrot.slane %v830, 5
    %v833 = vrot.slane %v273, 6
    %v834 = vor.u32 %v832, %v833
    %v835 = vsel %vm730, %v829, %v834
    %v836 = vrot.slane %v278, 5
    %v837 = vrot.slane %v281, 6
    %v838 = vor.u32 %v836, %v837
    %v839 = vrot.slane %v838, 4
    %v840 = vrot.slane %v291, 5
    %v841 = vrot.slane %v287, 6
    %v842 = vor.u32 %v840, %v841
    %v843 = vsel %vm730, %v839, %v842
    %v844 = vrot.slane %v842, 4
    %v845 = vshrl.u32 %v105, 16
    %v847 = vrot.slane %v845, 5
    %v848 = vrot.slane %v297, 6
    %v849 = vor.u32 %v847, %v848
    %v850 = vsel %vm730, %v844, %v849
    %v851 = vunpack.c.l.b16 %v738
    %v852 = vunpack.c.l.b16 %v745
    %v853 = vunpack.c.l.b16 %v753
    %v854 = vunpack.c.l.b16 %v760
    %v855 = vunpack.c.l.b16 %v768
    %v856 = vunpack.c.l.b16 %v775
    %v857 = vunpack.c.l.b16 %v783
    %v858 = vunpack.c.l.b16 %v790
    %v859 = vunpack.c.l.b16 %v798
    %v860 = vunpack.c.l.b16 %v805
    %v861 = vunpack.c.l.b16 %v813
    %v862 = vunpack.c.l.b16 %v820
    %v863 = vunpack.c.l.b16 %v828
    %v864 = vunpack.c.l.b16 %v835
    %v865 = vunpack.c.l.b16 %v843
    %v866 = vunpack.c.l.b16 %v850
    %v867 = vpack.c.b16 %v852, %v851
    %v868 = vpack.c.b16 %v854, %v853
    %v869 = vpack.c.b16 %v856, %v855
    %v870 = vpack.c.b16 %v858, %v857
    %v871 = vpack.c.b16 %v860, %v859
    %v872 = vpack.c.b16 %v862, %v861
    %v873 = vpack.c.b16 %v864, %v863
    %v874 = vpack.c.b16 %v866, %v865
    %v879 = vunpack.c.l.b16 %v78
    %v880 = vunpack.c.l.b16 %v79
    %v881 = vunpack.c.l.b16 %v80
    %v882 = vunpack.c.l.b16 %v81
    %v883 = vpack.c.b16 %v880, %v879
    %v884 = vpack.c.b16 %v882, %v881
    %v888 = vsel %vm337, %v867, 0
    %v891 = vsel %vm337, %v868, 0
    %v894 = vsel %vm337, %v869, 0
    %v897 = vsel %vm337, %v870, 0
    %v900 = vsel %vm337, %v871, 0
    %v903 = vsel %vm337, %v872, 0
    %v906 = vsel %vm337, %v873, 0
    %v909 = vsel %vm337, %v874, 0
    %911 = vmatpush.bf16.msra.mxu0 0
    %912 = vmatpush.bf16.msra.mxu0 0
    %913 = vmatpush.bf16.msra.mxu0 0
    %914 = vmatpush.bf16.msra.mxu0 0
    %915 = vmatpush.bf16.msra.mxu0 0
    %916 = vmatpush.bf16.msra.mxu0 0
    %917 = vmatpush.bf16.msra.mxu0 %v884
    %918 = vmatpush.bf16.msra.mxu0 %v883
    %919 = vmatmul.bf16.gmra.mxu0 %v888
    %v920 = vpop.f32.mrf.mxu0
    %v921 = vadd.f32 0.0, %v920
    %v922 = vpop.f32.mrf.mxu0
    %v923 = vadd.f32 0.0, %v922
    %924 = vmatmul.bf16.gmra.mxu0 %v891
    %v925 = vpop.f32.mrf.mxu0
    %v926 = vadd.f32 0.0, %v925
    %v927 = vpop.f32.mrf.mxu0
    %v928 = vadd.f32 0.0, %v927
    %929 = vmatmul.bf16.gmra.mxu0 %v894
    %v930 = vpop.f32.mrf.mxu0
    %v931 = vadd.f32 0.0, %v930
    %v932 = vpop.f32.mrf.mxu0
    %v933 = vadd.f32 0.0, %v932
    %934 = vmatmul.bf16.gmra.mxu0 %v897
    %v935 = vpop.f32.mrf.mxu0
    %v936 = vadd.f32 0.0, %v935
    %v937 = vpop.f32.mrf.mxu0
    %v938 = vadd.f32 0.0, %v937
    %939 = vmatmul.bf16.gmra.mxu0 %v900
    %v940 = vpop.f32.mrf.mxu0
    %v941 = vadd.f32 0.0, %v940
    %v942 = vpop.f32.mrf.mxu0
    %v943 = vadd.f32 0.0, %v942
    %944 = vmatmul.bf16.gmra.mxu0 %v903
    %v945 = vpop.f32.mrf.mxu0
    %v946 = vadd.f32 0.0, %v945
    %v947 = vpop.f32.mrf.mxu0
    %v948 = vadd.f32 0.0, %v947
    %949 = vmatmul.bf16.gmra.mxu0 %v906
    %v950 = vpop.f32.mrf.mxu0
    %v951 = vadd.f32 0.0, %v950
    %v952 = vpop.f32.mrf.mxu0
    %v953 = vadd.f32 0.0, %v952
    %954 = vmatmul.bf16.gmra.mxu0 %v909
    %v955 = vpop.f32.mrf.mxu0
    %v956 = vadd.f32 0.0, %v955
    %v957 = vpop.f32.mrf.mxu0
    %v958 = vadd.f32 0.0, %v957
    %959 = vdwg.mxu0
    %v960 = vadd.f32 %v712, %v921
    %v961 = vadd.f32 %v713, %v923
    %v962 = vadd.f32 %v714, %v926
    %v963 = vadd.f32 %v715, %v928
    %v964 = vadd.f32 %v716, %v931
    %v965 = vadd.f32 %v717, %v933
    %v966 = vadd.f32 %v718, %v936
    %v967 = vadd.f32 %v719, %v938
    %v968 = vadd.f32 %v720, %v941
    %v969 = vadd.f32 %v721, %v943
    %v970 = vadd.f32 %v722, %v946
    %v971 = vadd.f32 %v723, %v948
    %v972 = vadd.f32 %v724, %v951
    %v973 = vadd.f32 %v725, %v953
    %v974 = vadd.f32 %v726, %v956
    %v975 = vadd.f32 %v727, %v958
    %v976 = vlaneseq
    %v977 = vshrl.u32 %v976, 7
    %v978 = vadd.s32 %v977, 8
    %v979 = vlaneseq
    %v980 = vand.u32 %v979, 127
    %vm981 = vcmp.ge.s32.totalorder %v980, 16
    %vm982 = vcmp.lt.s32.totalorder %v980, 32
    %vm983 = vmand %vm981, %vm982
    %v984 = vsel %vm983, 13, 14
    %vm985 = vcmp.ge.s32.totalorder %v980, 32
    %vm986 = vcmp.lt.s32.totalorder %v980, 48
    %vm987 = vmand %vm985, %vm986
    %v988 = vsel %vm987, 12, %v984
    %vm989 = vcmp.le.s32.totalorder %v977, %v988
    %vm990 = vcmp.le.s32.totalorder %v978, %v988
    %v991 = vsel %vm989, 1, 0
    %v992 = vsel %vm990, 1, 0
    %vm993 = vcmp.eq.s32.totalorder %v991, 1
    %vm994 = vcmp.eq.s32.totalorder %v992, 1
    %v995 = vsel %vm993, %v960, -inf
    %v996 = vsel %vm994, %v961, -inf
    %v997 = vsel %vm993, %v962, -inf
    %v998 = vsel %vm994, %v963, -inf
    %v999 = vsel %vm993, %v964, -inf
    %v1000 = vsel %vm994, %v965, -inf
    %v1001 = vsel %vm993, %v966, -inf
    %v1002 = vsel %vm994, %v967, -inf
    %v1003 = vsel %vm993, %v968, -inf
    %v1004 = vsel %vm994, %v969, -inf
    %v1005 = vsel %vm993, %v970, -inf
    %v1006 = vsel %vm994, %v971, -inf
    %v1007 = vsel %vm993, %v972, -inf
    %v1008 = vsel %vm994, %v973, -inf
    %v1009 = vsel %vm993, %v974, -inf
    %v1010 = vsel %vm994, %v975, -inf
    %v1011 = vmax.f32 %v995, %v996
    %v1012 = vrot.slane %v1011, 4
    %v1013 = vmax.f32 %v1011, %v1012
    %v1014 = vrot.slane %v1013, 2
    %v1015 = vmax.f32 %v1013, %v1014
    %v1016 = vrot.slane %v1015, 1
    %v1017 = vmax.f32 %v1015, %v1016
    %v1018 = vmax.f32 %v997, %v998
    %v1019 = vrot.slane %v1018, 4
    %v1020 = vmax.f32 %v1018, %v1019
    %v1021 = vrot.slane %v1020, 2
    %v1022 = vmax.f32 %v1020, %v1021
    %v1023 = vrot.slane %v1022, 1
    %v1024 = vmax.f32 %v1022, %v1023
    %v1025 = vmax.f32 %v999, %v1000
    %v1026 = vrot.slane %v1025, 4
    %v1027 = vmax.f32 %v1025, %v1026
    %v1028 = vrot.slane %v1027, 2
    %v1029 = vmax.f32 %v1027, %v1028
    %v1030 = vrot.slane %v1029, 1
    %v1031 = vmax.f32 %v1029, %v1030
    %v1032 = vmax.f32 %v1001, %v1002
    %v1033 = vrot.slane %v1032, 4
    %v1034 = vmax.f32 %v1032, %v1033
    %v1035 = vrot.slane %v1034, 2
    %v1036 = vmax.f32 %v1034, %v1035
    %v1037 = vrot.slane %v1036, 1
    %v1038 = vmax.f32 %v1036, %v1037
    %v1039 = vmax.f32 %v1003, %v1004
    %v1040 = vrot.slane %v1039, 4
    %v1041 = vmax.f32 %v1039, %v1040
    %v1042 = vrot.slane %v1041, 2
    %v1043 = vmax.f32 %v1041, %v1042
    %v1044 = vrot.slane %v1043, 1
    %v1045 = vmax.f32 %v1043, %v1044
    %v1046 = vmax.f32 %v1005, %v1006
    %v1047 = vrot.slane %v1046, 4
    %v1048 = vmax.f32 %v1046, %v1047
    %v1049 = vrot.slane %v1048, 2
    %v1050 = vmax.f32 %v1048, %v1049
    %v1051 = vrot.slane %v1050, 1
    %v1052 = vmax.f32 %v1050, %v1051
    %v1053 = vmax.f32 %v1007, %v1008
    %v1054 = vrot.slane %v1053, 4
    %v1055 = vmax.f32 %v1053, %v1054
    %v1056 = vrot.slane %v1055, 2
    %v1057 = vmax.f32 %v1055, %v1056
    %v1058 = vrot.slane %v1057, 1
    %v1059 = vmax.f32 %v1057, %v1058
    %v1060 = vmax.f32 %v1009, %v1010
    %v1061 = vrot.slane %v1060, 4
    %v1062 = vmax.f32 %v1060, %v1061
    %v1063 = vrot.slane %v1062, 2
    %v1064 = vmax.f32 %v1062, %v1063
    %v1065 = vrot.slane %v1064, 1
    %v1066 = vmax.f32 %v1064, %v1065
    %v1067 = vld [vmem:[%s2] sm:$0x1]
    %v1069 = vperm.slane %v1067, 0
    %v1071 = vadd.f32 %v1017, %v1069
    %v1072 = vadd.f32 %v1024, %v1069
    %v1073 = vadd.f32 %v1031, %v1069
    %v1074 = vadd.f32 %v1038, %v1069
    %v1075 = vadd.f32 %v1045, %v1069
    %v1076 = vadd.f32 %v1052, %v1069
    %v1077 = vadd.f32 %v1059, %v1069
    %v1078 = vadd.f32 %v1066, %v1069
    %v1079 = vpack.c.bf16 %v1071, %v1071
    %v1080 = vpack.c.bf16 %v1072, %v1072
    %v1081 = vpack.c.bf16 %v1073, %v1073
    %v1082 = vpack.c.bf16 %v1074, %v1074
    %v1083 = vpack.c.bf16 %v1075, %v1075
    %v1084 = vpack.c.bf16 %v1076, %v1076
    %v1085 = vpack.c.bf16 %v1077, %v1077
    %v1086 = vpack.c.bf16 %v1078, %v1078
    %v1087 = vld [vmem:[%s3] sm:$0xf]
    %v1088 = vld [vmem:[%s3 + $0x4] sm:$0xf]
    %v1089 = vld [vmem:[%s3 + $0x8] sm:$0xf]
    %v1090 = vld [vmem:[%s3 + $0xc] sm:$0xf]
    %v1091 = vld [vmem:[%s3 + $0x10] sm:$0xf]
    %v1092 = vld [vmem:[%s3 + $0x14] sm:$0xf]
    %v1093 = vld [vmem:[%s3 + $0x18] sm:$0xf]
    %v1094 = vld [vmem:[%s3 + $0x1c] sm:$0xf]
    %v1095 = vld [vmem:[%s3 + $0x20] sm:$0xf]
    %v1096 = vld [vmem:[%s3 + $0x24] sm:$0xf]
    %v1097 = vld [vmem:[%s3 + $0x28] sm:$0xf]
    %v1098 = vld [vmem:[%s3 + $0x2c] sm:$0xf]
    %v1099 = vld [vmem:[%s3 + $0x30] sm:$0xf]
    %v1100 = vld [vmem:[%s3 + $0x34] sm:$0xf]
    %v1101 = vld [vmem:[%s3 + $0x38] sm:$0xf]
    %v1102 = vld [vmem:[%s3 + $0x3c] sm:$0xf]
    %v1103 = vld [vmem:[%s4] sm:$0x1]
    %v1105 = vperm.slane %v1103, 0
    %v1115 = vunpack.c.l.b16 %v1079
    %v1116 = vunpack.c.l.b16 %v1080
    %v1117 = vunpack.c.l.b16 %v1081
    %v1118 = vunpack.c.l.b16 %v1082
    %v1119 = vunpack.c.l.b16 %v1083
    %v1120 = vunpack.c.l.b16 %v1084
    %v1121 = vunpack.c.l.b16 %v1085
    %v1122 = vunpack.c.l.b16 %v1086
    %v1123 = vrot.slane %v1116, 7
    %vm1124 = vcmask 1041409
    %v1125 = vsel %vm1124, %v1123, %v1115
    %v1126 = vrot.slane %v1117, 6
    %vm1127 = vcmask 1042434
    %v1128 = vsel %vm1127, %v1126, %v1125
    %v1129 = vrot.slane %v1118, 5
    %vm1130 = vcmask 1043459
    %v1131 = vsel %vm1130, %v1129, %v1128
    %v1132 = vrot.slane %v1119, 4
    %vm1133 = vcmask 1044484
    %v1134 = vsel %vm1133, %v1132, %v1131
    %v1135 = vrot.slane %v1120, 3
    %vm1136 = vcmask 1045509
    %v1137 = vsel %vm1136, %v1135, %v1134
    %v1138 = vrot.slane %v1121, 2
    %vm1139 = vcmask 1046534
    %v1140 = vsel %vm1139, %v1138, %v1137
    %v1141 = vrot.slane %v1122, 1
    %vm1142 = vcmask 1047559
    %v1143 = vsel %vm1142, %v1141, %v1140
    %v1144 = vpack.c.b16 %v1143, %v1143
    %v1162 = vunpack.c.l.b16 %v1087
    %v1163 = vunpack.c.l.b16 %v1088
    %v1164 = vunpack.c.l.b16 %v1089
    %v1165 = vunpack.c.l.b16 %v1090
    %v1166 = vunpack.c.l.b16 %v1091
    %v1167 = vunpack.c.l.b16 %v1092
    %v1168 = vunpack.c.l.b16 %v1093
    %v1169 = vunpack.c.l.b16 %v1094
    %v1170 = vunpack.c.l.b16 %v1095
    %v1171 = vunpack.c.l.b16 %v1096
    %v1172 = vunpack.c.l.b16 %v1097
    %v1173 = vunpack.c.l.b16 %v1098
    %v1174 = vunpack.c.l.b16 %v1099
    %v1175 = vunpack.c.l.b16 %v1100
    %v1176 = vunpack.c.l.b16 %v1101
    %v1177 = vunpack.c.l.b16 %v1102
    %v1178 = vpack.c.b16 %v1163, %v1162
    %v1179 = vpack.c.b16 %v1165, %v1164
    %v1180 = vpack.c.b16 %v1167, %v1166
    %v1181 = vpack.c.b16 %v1169, %v1168
    %v1182 = vpack.c.b16 %v1171, %v1170
    %v1183 = vpack.c.b16 %v1173, %v1172
    %v1184 = vpack.c.b16 %v1175, %v1174
    %v1185 = vpack.c.b16 %v1177, %v1176
    %1194 = vmatpush.bf16.msra.mxu0 %v1185
    %1195 = vmatpush.bf16.msra.mxu0 %v1184
    %1196 = vmatpush.bf16.msra.mxu0 %v1183
    %1197 = vmatpush.bf16.msra.mxu0 %v1182
    %1198 = vmatpush.bf16.msra.mxu0 %v1181
    %1199 = vmatpush.bf16.msra.mxu0 %v1180
    %1200 = vmatpush.bf16.msra.mxu0 %v1179
    %1201 = vmatpush.bf16.msra.mxu0 %v1178
    %1202 = vmatmul.bf16.gmra.mxu0 %v1144
    %v1203 = vpop.f32.mrf.mxu0
    %v1204 = vadd.f32 %v1105, %v1203
    %v1205 = vpop.f32.mrf.mxu0
    %1206 = vdwg.mxu0
    %v1207 = vmax.f32 %v1204, 0.0
    %v1208 = vpack.c.bf16 %v1207, %v1207
    %v1209 = vld [vmem:[#allocation2] sm:$0xf]
    %v1210 = vld [vmem:[#allocation2 + $0x4] sm:$0xf]
    %v1211 = vld [vmem:[#allocation2 + $0x8] sm:$0xf]
    %v1212 = vld [vmem:[#allocation2 + $0xc] sm:$0xf]
    %v1213 = vld [vmem:[#allocation2 + $0x10] sm:$0xf]
    %v1214 = vld [vmem:[#allocation2 + $0x14] sm:$0xf]
    %v1215 = vld [vmem:[#allocation2 + $0x18] sm:$0xf]
    %v1216 = vld [vmem:[#allocation2 + $0x1c] sm:$0xf]
    %v1217 = vld [vmem:[#allocation2 + $0x20] sm:$0xf]
    %v1218 = vld [vmem:[#allocation2 + $0x24] sm:$0xf]
    %v1219 = vld [vmem:[#allocation2 + $0x28] sm:$0xf]
    %v1220 = vld [vmem:[#allocation2 + $0x2c] sm:$0xf]
    %v1221 = vld [vmem:[#allocation2 + $0x30] sm:$0xf]
    %v1222 = vld [vmem:[#allocation2 + $0x34] sm:$0xf]
    %v1223 = vld [vmem:[#allocation2 + $0x38] sm:$0xf]
    %v1224 = vld [vmem:[#allocation2 + $0x3c] sm:$0xf]
    %v1225 = vld [vmem:[%s6] sm:$0x1]
    %v1227 = vperm.slane %v1225, 0
    %v1245 = vunpack.c.l.b16 %v1209
    %v1246 = vunpack.c.l.b16 %v1210
    %v1247 = vunpack.c.l.b16 %v1211
    %v1248 = vunpack.c.l.b16 %v1212
    %v1249 = vunpack.c.l.b16 %v1213
    %v1250 = vunpack.c.l.b16 %v1214
    %v1251 = vunpack.c.l.b16 %v1215
    %v1252 = vunpack.c.l.b16 %v1216
    %v1253 = vunpack.c.l.b16 %v1217
    %v1254 = vunpack.c.l.b16 %v1218
    %v1255 = vunpack.c.l.b16 %v1219
    %v1256 = vunpack.c.l.b16 %v1220
    %v1257 = vunpack.c.l.b16 %v1221
    %v1258 = vunpack.c.l.b16 %v1222
    %v1259 = vunpack.c.l.b16 %v1223
    %v1260 = vunpack.c.l.b16 %v1224
    %v1261 = vpack.c.b16 %v1246, %v1245
    %v1262 = vpack.c.b16 %v1248, %v1247
    %v1263 = vpack.c.b16 %v1250, %v1249
    %v1264 = vpack.c.b16 %v1252, %v1251
    %v1265 = vpack.c.b16 %v1254, %v1253
    %v1266 = vpack.c.b16 %v1256, %v1255
    %v1267 = vpack.c.b16 %v1258, %v1257
    %v1268 = vpack.c.b16 %v1260, %v1259
    %1277 = vmatpush.bf16.msra.mxu0 %v1268
    %1278 = vmatpush.bf16.msra.mxu0 %v1267
    %1279 = vmatpush.bf16.msra.mxu0 %v1266
    %1280 = vmatpush.bf16.msra.mxu0 %v1265
    %1281 = vmatpush.bf16.msra.mxu0 %v1264
    %1282 = vmatpush.bf16.msra.mxu0 %v1263
    %1283 = vmatpush.bf16.msra.mxu0 %v1262
    %1284 = vmatpush.bf16.msra.mxu0 %v1261
    %1285 = vmatmul.bf16.gmra.mxu0 %v1208
    %v1286 = vpop.f32.mrf.mxu0
    %v1287 = vadd.f32 %v1227, %v1286
    %v1288 = vpop.f32.mrf.mxu0
    %1289 = vdwg.mxu0
    %v1290 = vmax.f32 %v1287, 0.0
    %v1291 = vpack.c.bf16 %v1290, %v1290
    %v1292 = vld [vmem:[#allocation5] sm:$0xf]
    %v1293 = vld [vmem:[#allocation5 + $0x4] sm:$0xf]
    %v1294 = vld [vmem:[#allocation5 + $0x8] sm:$0xf]
    %v1295 = vld [vmem:[#allocation5 + $0xc] sm:$0xf]
    %v1296 = vld [vmem:[#allocation5 + $0x10] sm:$0xf]
    %v1297 = vld [vmem:[#allocation5 + $0x14] sm:$0xf]
    %v1298 = vld [vmem:[#allocation5 + $0x18] sm:$0xf]
    %v1299 = vld [vmem:[#allocation5 + $0x1c] sm:$0xf]
    %v1300 = vld [vmem:[#allocation5 + $0x20] sm:$0xf]
    %v1301 = vld [vmem:[#allocation5 + $0x24] sm:$0xf]
    %v1302 = vld [vmem:[#allocation5 + $0x28] sm:$0xf]
    %v1303 = vld [vmem:[#allocation5 + $0x2c] sm:$0xf]
    %v1304 = vld [vmem:[#allocation5 + $0x30] sm:$0xf]
    %v1305 = vld [vmem:[#allocation5 + $0x34] sm:$0xf]
    %v1306 = vld [vmem:[#allocation5 + $0x38] sm:$0xf]
    %v1307 = vld [vmem:[#allocation5 + $0x3c] sm:$0xf]
    %v1308 = vld [vmem:[%s8] sm:$0x1]
    %v1310 = vperm.slane %v1308, 0
    %v1328 = vunpack.c.l.b16 %v1292
    %v1329 = vunpack.c.l.b16 %v1293
    %v1330 = vunpack.c.l.b16 %v1294
    %v1331 = vunpack.c.l.b16 %v1295
    %v1332 = vunpack.c.l.b16 %v1296
    %v1333 = vunpack.c.l.b16 %v1297
    %v1334 = vunpack.c.l.b16 %v1298
    %v1335 = vunpack.c.l.b16 %v1299
    %v1336 = vunpack.c.l.b16 %v1300
    %v1337 = vunpack.c.l.b16 %v1301
    %v1338 = vunpack.c.l.b16 %v1302
    %v1339 = vunpack.c.l.b16 %v1303
    %v1340 = vunpack.c.l.b16 %v1304
    %v1341 = vunpack.c.l.b16 %v1305
    %v1342 = vunpack.c.l.b16 %v1306
    %v1343 = vunpack.c.l.b16 %v1307
    %v1344 = vpack.c.b16 %v1329, %v1328
    %v1345 = vpack.c.b16 %v1331, %v1330
    %v1346 = vpack.c.b16 %v1333, %v1332
    %v1347 = vpack.c.b16 %v1335, %v1334
    %v1348 = vpack.c.b16 %v1337, %v1336
    %v1349 = vpack.c.b16 %v1339, %v1338
    %v1350 = vpack.c.b16 %v1341, %v1340
    %v1351 = vpack.c.b16 %v1343, %v1342
    %1360 = vmatpush.bf16.msra.mxu0 %v1351
    %1361 = vmatpush.bf16.msra.mxu0 %v1350
    %1362 = vmatpush.bf16.msra.mxu0 %v1349
    %1363 = vmatpush.bf16.msra.mxu0 %v1348
    %1364 = vmatpush.bf16.msra.mxu0 %v1347
    %1365 = vmatpush.bf16.msra.mxu0 %v1346
    %1366 = vmatpush.bf16.msra.mxu0 %v1345
    %1367 = vmatpush.bf16.msra.mxu0 %v1344
    %1368 = vmatmul.bf16.gmra.mxu0 %v1291
    %v1369 = vpop.f32.mrf.mxu0
    %v1370 = vadd.f32 %v1310, %v1369
    %v1371 = vpop.f32.mrf.mxu0
    %1372 = vdwg.mxu0
    %1373 = vst [vmem:[#allocation7] sm:$0xff] %v1370
    // Predicated region
    $region46: #{tpu_custom_call.1} parent=1 // pred_check
      _
    $region47: #{tpu_custom_call.1} parent=1 // pred_check_branch
      %1375 = sbr.rel (0) target = $region49
    $region48: #{tpu_custom_call.1} parent=1 // pred_region
      %1377 = vsyncadd [#allocation4], 0
      %s1379 = sshll.u32 [#allocation7], 4
      %s1380 = int_to_ptr.vmem [resolvable:$true] %s1379
      %s1381 = sshll.u32 %s9, 4
      %s1382 = int_to_ptr.hbm [resolvable:$true] %s1381
      %1384 = dma.vmem_to_hbm [thread:$0]  %s1380, 128, %s1382, [#allocation4]
    $region49: #{tpu_custom_call.1} parent=1 // pred_fallthru
      _
    // Predicated region
    $region50: #{tpu_custom_call.1} parent=1 // pred_check
      _
    $region51: #{tpu_custom_call.1} parent=1 // pred_check_branch
      %1386 = sbr.rel (0) target = $region53
    $region52: #{tpu_custom_call.1} parent=1 // pred_region
      %1388 = dma.done [#allocation4], 128
    $region53: #{tpu_custom_call.1} parent=1 // pred_fallthru
      _
    %1389 = vsyncpa [#allocation3], 1
    %1390 = vsyncpa [#allocation6], 1
    %1391 = vsyncpa [#allocation4], 1

</llo_original>
